<compile_context>
chip_gen: v6e
topology: v6e:2x2x1
jax: 0.10.0
libtpu: 0.0.40
codegen_flags: <defaults>
</compile_context>

<pallas_src>
import functools

import jax
import jax.numpy as jnp
from jax import lax
from jax.experimental import pallas as pl
from jax.experimental.pallas import tpu as pltpu


def _round_up(x, m):
    return ((x + m - 1) // m) * m


def _jumpsae_kernel(x_ref, w_enc_ref, w_dec_ref, b_dec_ref, b_enc_ref, theta_ref,
                    feats_ref, recon_ref, partials_ref,
                    xc_ref, gate_acc_ref,
                    *, compute_dtype, tb, batch, need_row_mask):
    """Grid = (batch_tiles, hidden_tiles); hidden axis is the reduction axis."""
    i = pl.program_id(0)
    h = pl.program_id(1)
    nh = pl.num_programs(1)

    # Once per batch tile: hoist centering/cast out of the h loop, zero residents.
    @pl.when(h == 0)
    def _init():
        xc_ref[...] = (x_ref[...] - b_dec_ref[...]).astype(compute_dtype)  # (tb, Dp)
        recon_ref[...] = jnp.zeros_like(recon_ref)
        gate_acc_ref[...] = jnp.zeros_like(gate_acc_ref)

    # ---- encode for this hidden tile: x_cent @ W_enc[:, h] + b_enc[h] ----
    x_proj = jnp.dot(xc_ref[...], w_enc_ref[...],
                     preferred_element_type=jnp.float32) + b_enc_ref[...]   # (tb, th) f32

    # JumpReLU: gate = heaviside(x_proj - theta) (strict >, matching torch),
    # acts = gate * relu(x_proj) as a single select.
    gate = (x_proj - theta_ref[...]) > 0.0
    acts = jnp.where(gate, jnp.maximum(x_proj, 0.0), 0.0)                   # (tb, th) f32

    feats_ref[...] = acts.astype(feats_ref.dtype)

    # ---- decode partial: accumulate acts @ W_dec[h, :] into resident f32 block ----
    recon_ref[...] += jnp.dot(acts.astype(compute_dtype), w_dec_ref[...],
                              preferred_element_type=jnp.float32)           # (tb, Dp)

    # ---- lane-only loss partial: one lane-reduce per step, scalar reduce deferred ----
    gate_acc_ref[...] += jnp.sum(gate.astype(jnp.float32), axis=-1, keepdims=True)

    # ---- finalize on the last hidden tile: bias add + loss reductions ----
    @pl.when(h == nh - 1)
    def _finalize():
        x = x_ref[...]                                   # original f32 x (resident)
        recon = recon_ref[...] + b_dec_ref[...]          # decoder bias added exactly once
        recon_ref[...] = recon
        err2 = (x - recon) ** 2
        gate_rows = gate_acc_ref[...]                    # (tb, 1)
        if need_row_mask:
            row = i * tb + lax.broadcasted_iota(jnp.int32, (tb, 1), 0)
            valid = (row < batch).astype(jnp.float32)
            err2 = err2 * valid
            gate_rows = gate_rows * valid
        err_s = jnp.sum(err2)                            # padded D cols contribute exact 0
        xsq_s = jnp.sum(x * x)                           # padded rows/cols are exact 0
        g_s = jnp.sum(gate_rows)
        lane = lax.broadcasted_iota(jnp.int32, partials_ref.shape, 2)   # (1, 8, 128)
        partials_ref[...] = (jnp.where(lane == 0, g_s, 0.0)
                             + jnp.where(lane == 1, err_s, 0.0)
                             + jnp.where(lane == 2, xsq_s, 0.0))


def _vmem_limit_bytes(tb, th, d_pad, compute_dtype, feats_dtype, weight_buffers):
    """Double-buffered working-set estimate + ~30% headroom."""
    wb = jnp.dtype(compute_dtype).itemsize
    fb = jnp.dtype(feats_dtype).itemsize
    est = 0
    est += 2 * tb * d_pad * 4                       # x (f32), double-buffered
    est += weight_buffers * d_pad * th * wb         # W_enc stream
    est += weight_buffers * th * d_pad * wb         # W_dec stream
    est += 2 * (d_pad * 4 + 2 * th * 4)             # b_dec, b_enc, theta
    est += 2 * tb * th * fb                         # feats out
    est += 2 * tb * d_pad * 4                       # recon out (f32 resident accumulator)
    est += 2 * 8 * 128 * 4                          # loss-partials out
    est += tb * d_pad * wb                          # x_cent scratch
    est += tb * 128 * 4                             # gate row-sum scratch (lane padded)
    est = int(est * 1.3) + (2 << 20)
    return max(32 << 20, min(est, 128 << 20))


def prepare_jumpsae_params(W_enc, W_dec, b_enc, theta, b_dec, *,
                           th=512, compute_dtype=jnp.bfloat16):
    """Pad (lane-dense) and cast the weights ONCE, outside the per-call wrapper.
    Reuse the returned dict across calls in a training loop."""
    D, H = W_enc.shape
    assert W_dec.shape == (H, D)
    d_pad = _round_up(D, 128)
    th = _round_up(min(th, _round_up(H, 128)), 128)
    h_pad = _round_up(H, th)
    w_enc_p = jnp.pad(W_enc.astype(compute_dtype), ((0, d_pad - D), (0, h_pad - H)))
    w_dec_p = jnp.pad(W_dec.astype(compute_dtype), ((0, h_pad - H), (0, d_pad - D)))
    b_dec_p = jnp.pad(b_dec.astype(jnp.float32), (0, d_pad - D)).reshape(1, d_pad)
    b_enc_p = jnp.pad(b_enc.astype(jnp.float32), (0, h_pad - H)).reshape(1, h_pad)
    theta_p = jnp.pad(theta.astype(jnp.float32), (0, h_pad - H)).reshape(1, h_pad)
    return dict(W_enc=w_enc_p, W_dec=w_dec_p, b_dec=b_dec_p, b_enc=b_enc_p,
                theta=theta_p, D=D, H=H, d_pad=d_pad, h_pad=h_pad, th=th,
                compute_dtype=compute_dtype)


def jumpsae_forward_prepared(x, params, *, target_l0, tb=256,
                             feats_dtype=None, weight_buffers=2,
                             vmem_limit_bytes=None):
    """JumpSAE forward with pre-padded / pre-cast params (see prepare_jumpsae_params).

    Per-generation tuning (weights bf16):
      v5e: tb=256,  th=256-512  (raise the 16 MiB default scoped VMEM limit)
      v6e: tb=768-1024, th=512  (256-multiples to fill the 2x256^2 MXU)
      v7x: tb=512,  th=256      (64 MiB VMEM/TC; optionally weight_buffers=3)
    """
    B, D = x.shape
    assert D == params["D"], "input feature size mismatch with prepared params"
    compute_dtype = params["compute_dtype"]
    d_pad, h_pad, th, H = params["d_pad"], params["h_pad"], params["th"], params["H"]
    if feats_dtype is None:
        feats_dtype = compute_dtype

    # --- batch tile sizing / padding ---
    sub = 16 if jnp.dtype(feats_dtype).itemsize < 4 else 8
    tb = _round_up(min(tb, _round_up(B, sub)), sub)
    b_pad = _round_up(B, tb)
    need_row_mask = (b_pad != B)

    xp = jnp.pad(x.astype(jnp.float32), ((0, b_pad - B), (0, d_pad - D)))

    nb = b_pad // tb
    nh = h_pad // th

    if vmem_limit_bytes is None:
        vmem_limit_bytes = _vmem_limit_bytes(tb, th, d_pad, compute_dtype,
                                             feats_dtype, weight_buffers)

    # Deeper pipelining on the two streamed weight operands only (optional, v7x).
    w_kw = {} if weight_buffers == 2 else {"pipeline_mode": pl.Buffered(weight_buffers)}

    kernel = functools.partial(_jumpsae_kernel, compute_dtype=compute_dtype,
                               tb=tb, batch=B, need_row_mask=need_row_mask)

    feats, recon, partials = pl.pallas_call(
        kernel,
        out_shape=(
            jax.ShapeDtypeStruct((b_pad, h_pad), feats_dtype),      # feature activations
            jax.ShapeDtypeStruct((b_pad, d_pad), jnp.float32),      # reconstruction
            jax.ShapeDtypeStruct((nb, 8, 128), jnp.float32),        # per-tile loss partials
        ),
        grid_spec=pltpu.PrefetchScalarGridSpec(
            num_scalar_prefetch=0,
            grid=(nb, nh),
            in_specs=[
                pl.BlockSpec((tb, d_pad), lambda i, h: (i, 0)),           # x (f32, resident/h)
                pl.BlockSpec((d_pad, th), lambda i, h: (0, h), **w_kw),   # W_enc (streamed)
                pl.BlockSpec((th, d_pad), lambda i, h: (h, 0), **w_kw),   # W_dec (streamed)
                pl.BlockSpec((1, d_pad), lambda i, h: (0, 0)),            # b_dec (tiny)
                pl.BlockSpec((1, th), lambda i, h: (0, h)),               # b_enc
                pl.BlockSpec((1, th), lambda i, h: (0, h)),               # theta
            ],
            out_specs=[
                pl.BlockSpec((tb, th), lambda i, h: (i, h)),              # feats
                pl.BlockSpec((tb, d_pad), lambda i, h: (i, 0)),           # recon (resident acc)
                pl.BlockSpec((1, 8, 128), lambda i, h: (i, 0, 0)),        # loss partials
            ],
            scratch_shapes=[
                pltpu.VMEM((tb, d_pad), compute_dtype),   # x_cent (hoisted, per batch tile)
                pltpu.VMEM((tb, 1), jnp.float32),         # gate row-sum accumulator
            ],
        ),
        compiler_params=pltpu.CompilerParams(
            dimension_semantics=("parallel", "arbitrary"),  # batch parallel, H = reduction
            vmem_limit_bytes=vmem_limit_bytes,
        ),
    )(xp, params["W_enc"], params["W_dec"], params["b_dec"],
      params["b_enc"], params["theta"])

    # Final (tiny) reductions in f32 JAX glue.
    gate_sum = jnp.sum(partials[:, 0, 0])
    err_sum = jnp.sum(partials[:, 0, 1])
    xsq_sum = jnp.sum(partials[:, 0, 2])

    mean_l0_value = gate_sum / jnp.float32(B)
    l0_loss = (mean_l0_value / jnp.float32(target_l0) - 1.0) ** 2
    # ((x - recon)^2).mean() / (x^2).mean() == err_sum / xsq_sum (counts cancel)
    mse_loss = err_sum / xsq_sum

    return {
        "feature_activations": feats[:B, :H],
        "output": recon[:B, :D],
        "mean_l0_value": mean_l0_value,
        "l0_loss": l0_loss,
        "mse_loss": mse_loss,
    }


def jumpsae_forward(x, W_enc, W_dec, b_enc, theta, b_dec, *, target_l0,
                    tb=256, th=512, compute_dtype=jnp.bfloat16, feats_dtype=None,
                    weight_buffers=2, vmem_limit_bytes=None):
    """Convenience wrapper: pads/casts params then runs the kernel.  For training
    loops, call prepare_jumpsae_params once and use jumpsae_forward_prepared."""
    params = prepare_jumpsae_params(W_enc, W_dec, b_enc, theta, b_dec,
                                    th=th, compute_dtype=compute_dtype)
    return jumpsae_forward_prepared(x, params, target_l0=target_l0, tb=tb,
                                    feats_dtype=feats_dtype,
                                    weight_buffers=weight_buffers,
                                    vmem_limit_bytes=vmem_limit_bytes)


def init_params(key, input_size, hidden_size):
    # Matches JumpSAE.__init__: W_dec ~ row-normalized randn(H, D); W_enc = W_dec.T;
    # b_enc, theta, b_dec = zeros.
    W_dec = jax.random.normal(key, (hidden_size, input_size), dtype=jnp.float32)
    W_dec = W_dec / jnp.linalg.norm(W_dec, axis=-1, keepdims=True)
    W_enc = W_dec.T
    b_enc = jnp.zeros((hidden_size,), jnp.float32)
    theta = jnp.zeros((hidden_size,), jnp.float32)
    b_dec = jnp.zeros((input_size,), jnp.float32)
    return W_enc, W_dec, b_enc, theta, b_dec


def _reference(x, W_enc, W_dec, b_enc, theta, b_dec, target_l0):
    x_cent = x - b_dec
    x_proj = x_cent @ W_enc + b_enc
    gate = ((x_proj - theta) > 0).astype(jnp.float32)
    acts = gate * jnp.maximum(x_proj, 0.0)
    recon = acts @ W_dec + b_dec
    mean_l0 = gate.sum(-1).mean()
    l0_loss = (mean_l0 / target_l0 - 1.0) ** 2
    mse = jnp.mean((x - recon) ** 2) / jnp.mean(x ** 2)
    return acts, recon, mean_l0, l0_loss, mse


if __name__ == "__main__":
    input_size = 64     # padded to 128 lanes inside the wrapper
    hidden_size = 128
    batch = 16
    target_l0 = 32.0

    key = jax.random.PRNGKey(0)
    k_param, k_x, k_param2, k_x2 = jax.random.split(key, 4)

    W_enc, W_dec, b_enc, theta, b_dec = init_params(k_param, input_size, hidden_size)
    x = jax.random.normal(k_x, (batch, input_size), dtype=jnp.float32)

    acts_r, recon_r, ml0_r, l0_r, mse_r = _reference(x, W_enc, W_dec, b_enc, theta,
                                                     b_dec, target_l0)

    # --- f32 compute path: exact match to the PyTorch forward semantics ---
    out = jumpsae_forward(x, W_enc, W_dec, b_enc, theta, b_dec,
                          target_l0=target_l0,
                          compute_dtype=jnp.float32, feats_dtype=jnp.float32)
    jax.block_until_ready(out)
    assert out["feature_activations"].shape == (batch, hidden_size)
    assert out["output"].shape == (batch, input_size)
    assert jnp.allclose(out["feature_activations"], acts_r, atol=1e-4)
    assert jnp.allclose(out["output"], recon_r, atol=1e-4)
    assert jnp.allclose(out["mse_loss"], mse_r, atol=1e-4)
    assert jnp.allclose(out["mean_l0_value"], ml0_r, atol=1e-3)
    assert jnp.allclose(out["l0_loss"], l0_r, atol=1e-3)

    # --- multi-tile path: batch padding + row mask + H-axis accumulation (f32) ---
    W_enc2, W_dec2, b_enc2, theta2, b_dec2 = init_params(k_param2, input_size, 256)
    x2 = jax.random.normal(k_x2, (20, input_size), dtype=jnp.float32)
    out2 = jumpsae_forward(x2, W_enc2, W_dec2, b_enc2, theta2, b_dec2,
                           target_l0=target_l0, tb=8, th=128,
                           compute_dtype=jnp.float32, feats_dtype=jnp.float32)
    jax.block_until_ready(out2)
    acts2_r, recon2_r, ml02_r, l02_r, mse2_r = _reference(x2, W_enc2, W_dec2, b_enc2,
                                                          theta2, b_dec2, target_l0)
    assert jnp.allclose(out2["feature_activations"], acts2_r, atol=1e-4)
    assert jnp.allclose(out2["output"], recon2_r, atol=1e-4)
    assert jnp.allclose(out2["mse_loss"], mse2_r, atol=1e-4)
    assert jnp.allclose(out2["mean_l0_value"], ml02_r, atol=1e-3)

    # --- default (bf16 MXU) perf path: tolerance check against the f32 reference ---
    params_bf16 = prepare_jumpsae_params(W_enc, W_dec, b_enc, theta, b_dec,
                                         th=512, compute_dtype=jnp.bfloat16)
    out_bf16 = jumpsae_forward_prepared(x, params_bf16, target_l0=target_l0, tb=256)
    jax.block_until_ready(out_bf16)
    assert out_bf16["feature_activations"].dtype == jnp.bfloat16
    assert jnp.allclose(out_bf16["feature_activations"].astype(jnp.float32), acts_r,
                        atol=5e-2, rtol=5e-2)
    assert jnp.allclose(out_bf16["output"], recon_r, atol=5e-2, rtol=5e-2)
    assert jnp.allclose(out_bf16["mse_loss"], mse_r, rtol=5e-2, atol=1e-3)
    # Gate counts can flip for pre-activations within bf16 rounding of theta.
    assert jnp.abs(out_bf16["mean_l0_value"] - ml0_r) <= 4.0
    assert bool(jnp.isfinite(out_bf16["l0_loss"]))

    print("KERNEL_OK")
</pallas_src>

<mosaic_0001>
module attributes {stable_mosaic.version = 11 : i64} {
  func.func @_jumpsae_kernel(%arg0: i32, %arg1: i32, %arg2: memref<16x128xf32, #tpu.memory_space<vmem>>, %arg3: memref<128x128xf32, #tpu.memory_space<vmem>>, %arg4: memref<128x128xf32, #tpu.memory_space<vmem>>, %arg5: memref<1x128xf32, #tpu.memory_space<vmem>>, %arg6: memref<1x128xf32, #tpu.memory_space<vmem>>, %arg7: memref<1x128xf32, #tpu.memory_space<vmem>>, %arg8: memref<16x128xf32, #tpu.memory_space<vmem>>, %arg9: memref<16x128xf32, #tpu.memory_space<vmem>>, %arg10: memref<1x8x128xf32, #tpu.memory_space<vmem>>, %arg11: memref<16x128xf32, #tpu.memory_space<vmem>>, %arg12: memref<16x1xf32, #tpu.memory_space<vmem>>) attributes {dimension_semantics = [#tpu.dimension_semantics<parallel>, #tpu.dimension_semantics<arbitrary>], iteration_bounds = array<i64: 1, 1>, scalar_prefetch = 0 : i64, scratch_operands = 2 : i64, tpu.core_type = #tpu.core_type<tc>, window_params = [{transform_indices = @transform_0, window_bounds = array<i64: 16, 128>}, {transform_indices = @transform_1, window_bounds = array<i64: 128, 128>}, {transform_indices = @transform_2, window_bounds = array<i64: 128, 128>}, {pipeline_mode = #tpu.pipeline_mode<synchronous>, transform_indices = @transform_3, window_bounds = array<i64: 1, 128>}, {transform_indices = @transform_4, window_bounds = array<i64: 1, 128>}, {transform_indices = @transform_5, window_bounds = array<i64: 1, 128>}, {transform_indices = @transform_6, window_bounds = array<i64: 16, 128>}, {transform_indices = @transform_7, window_bounds = array<i64: 16, 128>}, {transform_indices = @transform_8, window_bounds = array<i64: 1, 8, 128>}]} {
    %c0_i32 = arith.constant 0 : i32
    %0 = arith.cmpi eq, %arg1, %c0_i32 : i32
    %1 = arith.extui %0 : i1 to i32
    %c0_i32_0 = arith.constant 0 : i32
    %2 = arith.cmpi ne, %1, %c0_i32_0 : i32
    scf.if %2 {
      %c0_27 = arith.constant 0 : index
      %c0_28 = arith.constant 0 : index
      %34 = vector.load %arg2[%c0_27, %c0_28] : memref<16x128xf32, #tpu.memory_space<vmem>>, vector<16x128xf32>
      %c0_29 = arith.constant 0 : index
      %c0_30 = arith.constant 0 : index
      %35 = vector.load %arg5[%c0_29, %c0_30] : memref<1x128xf32, #tpu.memory_space<vmem>>, vector<1x128xf32>
      %36 = vector.broadcast %35 : vector<1x128xf32> to vector<16x128xf32>
      %37 = arith.subf %34, %36 : vector<16x128xf32>
      %c0_31 = arith.constant 0 : index
      %c0_32 = arith.constant 0 : index
      %38 = vector.load %arg11[%c0_31, %c0_32] : memref<16x128xf32, #tpu.memory_space<vmem>>, vector<16x128xf32>
      tpu.vector_store %arg11[%c0_31, %c0_32], %37 {strides = array<i32>} : memref<16x128xf32, #tpu.memory_space<vmem>>, vector<16x128xf32>,
      %cst_33 = arith.constant 0.000000e+00 : f32
      %39 = vector.broadcast %cst_33 : f32 to vector<16x128xf32>
      %c0_34 = arith.constant 0 : index
      %c0_35 = arith.constant 0 : index
      %40 = vector.load %arg9[%c0_34, %c0_35] : memref<16x128xf32, #tpu.memory_space<vmem>>, vector<16x128xf32>
      tpu.vector_store %arg9[%c0_34, %c0_35], %39 {strides = array<i32>} : memref<16x128xf32, #tpu.memory_space<vmem>>, vector<16x128xf32>,
      %cst_36 = arith.constant 0.000000e+00 : f32
      %41 = vector.broadcast %cst_36 : f32 to vector<16x1xf32>
      %c0_37 = arith.constant 0 : index
      %c0_38 = arith.constant 0 : index
      %42 = vector.load %arg12[%c0_37, %c0_38] : memref<16x1xf32, #tpu.memory_space<vmem>>, vector<16x1xf32>
      tpu.vector_store %arg12[%c0_37, %c0_38], %41 {strides = array<i32>} : memref<16x1xf32, #tpu.memory_space<vmem>>, vector<16x1xf32>,
    } else {
    }
    %c0 = arith.constant 0 : index
    %c0_1 = arith.constant 0 : index
    %3 = vector.load %arg11[%c0, %c0_1] : memref<16x128xf32, #tpu.memory_space<vmem>>, vector<16x128xf32>
    %c0_2 = arith.constant 0 : index
    %c0_3 = arith.constant 0 : index
    %4 = vector.load %arg3[%c0_2, %c0_3] : memref<128x128xf32, #tpu.memory_space<vmem>>, vector<128x128xf32>
    %cst = arith.constant dense<0.000000e+00> : vector<16x128xf32>
    %5 = tpu.matmul %3, %4, %cst {dimension_numbers = #tpu.dot_dimension_numbers<[1], [0], [0], [1], [0, 0, 1, 1], [], []>} : vector<16x128xf32>, vector<128x128xf32>, vector<16x128xf32> -> vector<16x128xf32>
    %c0_4 = arith.constant 0 : index
    %c0_5 = arith.constant 0 : index
    %6 = vector.load %arg6[%c0_4, %c0_5] : memref<1x128xf32, #tpu.memory_space<vmem>>, vector<1x128xf32>
    %7 = vector.broadcast %6 : vector<1x128xf32> to vector<16x128xf32>
    %8 = arith.addf %5, %7 : vector<16x128xf32>
    %c0_6 = arith.constant 0 : index
    %c0_7 = arith.constant 0 : index
    %9 = vector.load %arg7[%c0_6, %c0_7] : memref<1x128xf32, #tpu.memory_space<vmem>>, vector<1x128xf32>
    %10 = vector.broadcast %9 : vector<1x128xf32> to vector<16x128xf32>
    %11 = arith.subf %8, %10 : vector<16x128xf32>
    %cst_8 = arith.constant 0.000000e+00 : f32
    %12 = vector.broadcast %cst_8 : f32 to vector<16x128xf32>
    %13 = arith.cmpf ogt, %11, %12 : vector<16x128xf32>
    %cst_9 = arith.constant 0.000000e+00 : f32
    %14 = vector.broadcast %cst_9 : f32 to vector<16x128xf32>
    %15 = arith.maximumf %8, %14 : vector<16x128xf32>
    %cst_10 = arith.constant 0.000000e+00 : f32
    %16 = vector.broadcast %cst_10 : f32 to vector<16x128xf32>
    %17 = arith.select %13, %15, %16 : vector<16x128xi1>, vector<16x128xf32>
    %c0_11 = arith.constant 0 : index
    %c0_12 = arith.constant 0 : index
    %18 = vector.load %arg8[%c0_11, %c0_12] : memref<16x128xf32, #tpu.memory_space<vmem>>, vector<16x128xf32>
    tpu.vector_store %arg8[%c0_11, %c0_12], %17 {strides = array<i32>} : memref<16x128xf32, #tpu.memory_space<vmem>>, vector<16x128xf32>,
    %c0_13 = arith.constant 0 : index
    %c0_14 = arith.constant 0 : index
    %19 = vector.load %arg9[%c0_13, %c0_14] : memref<16x128xf32, #tpu.memory_space<vmem>>, vector<16x128xf32>
    %c0_15 = arith.constant 0 : index
    %c0_16 = arith.constant 0 : index
    %20 = vector.load %arg4[%c0_15, %c0_16] : memref<128x128xf32, #tpu.memory_space<vmem>>, vector<128x128xf32>
    %cst_17 = arith.constant dense<0.000000e+00> : vector<16x128xf32>
    %21 = tpu.matmul %17, %20, %cst_17 {dimension_numbers = #tpu.dot_dimension_numbers<[1], [0], [0], [1], [0, 0, 1, 1], [], []>} : vector<16x128xf32>, vector<128x128xf32>, vector<16x128xf32> -> vector<16x128xf32>
    %22 = arith.addf %19, %21 : vector<16x128xf32>
    %c0_18 = arith.constant 0 : index
    %c0_19 = arith.constant 0 : index
    %23 = vector.load %arg9[%c0_18, %c0_19] : memref<16x128xf32, #tpu.memory_space<vmem>>, vector<16x128xf32>
    tpu.vector_store %arg9[%c0_18, %c0_19], %22 {strides = array<i32>} : memref<16x128xf32, #tpu.memory_space<vmem>>, vector<16x128xf32>,
    %c0_20 = arith.constant 0 : index
    %c0_21 = arith.constant 0 : index
    %24 = vector.load %arg12[%c0_20, %c0_21] : memref<16x1xf32, #tpu.memory_space<vmem>>, vector<16x1xf32>
    %25 = arith.extui %13 : vector<16x128xi1> to vector<16x128xi32>
    %26 = arith.sitofp %25 : vector<16x128xi32> to vector<16x128xf32>
    %cst_22 = arith.constant dense<0.000000e+00> : vector<16xf32>
    %27 = vector.multi_reduction <add>, %26, %cst_22 [1] : vector<16x128xf32> to vector<16xf32>
    %28 = vector.shape_cast %27 : vector<16xf32> to vector<16x1xf32>
    %29 = arith.addf %24, %28 : vector<16x1xf32>
    %c0_23 = arith.constant 0 : index
    %c0_24 = arith.constant 0 : index
    %30 = vector.load %arg12[%c0_23, %c0_24] : memref<16x1xf32, #tpu.memory_space<vmem>>, vector<16x1xf32>
    tpu.vector_store %arg12[%c0_23, %c0_24], %29 {strides = array<i32>} : memref<16x1xf32, #tpu.memory_space<vmem>>, vector<16x1xf32>,
    %c0_i32_25 = arith.constant 0 : i32
    %31 = arith.cmpi eq, %arg1, %c0_i32_25 : i32
    %32 = arith.extui %31 : i1 to i32
    %c0_i32_26 = arith.constant 0 : i32
    %33 = arith.cmpi ne, %32, %c0_i32_26 : i32
    scf.if %33 {
      %c0_27 = arith.constant 0 : index
      %c0_28 = arith.constant 0 : index
      %34 = vector.load %arg2[%c0_27, %c0_28] : memref<16x128xf32, #tpu.memory_space<vmem>>, vector<16x128xf32>
      %c0_29 = arith.constant 0 : index
      %c0_30 = arith.constant 0 : index
      %35 = vector.load %arg9[%c0_29, %c0_30] : memref<16x128xf32, #tpu.memory_space<vmem>>, vector<16x128xf32>
      %c0_31 = arith.constant 0 : index
      %c0_32 = arith.constant 0 : index
      %36 = vector.load %arg5[%c0_31, %c0_32] : memref<1x128xf32, #tpu.memory_space<vmem>>, vector<1x128xf32>
      %37 = vector.broadcast %36 : vector<1x128xf32> to vector<16x128xf32>
      %38 = arith.addf %35, %37 : vector<16x128xf32>
      %c0_33 = arith.constant 0 : index
      %c0_34 = arith.constant 0 : index
      %39 = vector.load %arg9[%c0_33, %c0_34] : memref<16x128xf32, #tpu.memory_space<vmem>>, vector<16x128xf32>
      tpu.vector_store %arg9[%c0_33, %c0_34], %38 {strides = array<i32>} : memref<16x128xf32, #tpu.memory_space<vmem>>, vector<16x128xf32>,
      %40 = arith.subf %34, %38 : vector<16x128xf32>
      %41 = arith.mulf %40, %40 : vector<16x128xf32>
      %c0_35 = arith.constant 0 : index
      %c0_36 = arith.constant 0 : index
      %42 = vector.load %arg12[%c0_35, %c0_36] : memref<16x1xf32, #tpu.memory_space<vmem>>, vector<16x1xf32>
      %43 = vector.shape_cast %41 : vector<16x128xf32> to vector<1x16x128xf32>
      %cst_37 = arith.constant dense<0.000000e+00> : vector<1xf32>
      %44 = vector.multi_reduction <add>, %43, %cst_37 [1, 2] : vector<1x16x128xf32> to vector<1xf32>
      %45 = vector.shape_cast %44 : vector<1xf32> to vector<1x1x1xf32>
      %46 = vector.extract %45[0, 0, 0] : f32 from vector<1x1x1xf32>
      %47 = arith.mulf %34, %34 : vector<16x128xf32>
      %48 = vector.shape_cast %47 : vector<16x128xf32> to vector<1x16x128xf32>
      %cst_38 = arith.constant dense<0.000000e+00> : vector<1xf32>
      %49 = vector.multi_reduction <add>, %48, %cst_38 [1, 2] : vector<1x16x128xf32> to vector<1xf32>
      %50 = vector.shape_cast %49 : vector<1xf32> to vector<1x1x1xf32>
      %51 = vector.extract %50[0, 0, 0] : f32 from vector<1x1x1xf32>
      %52 = vector.shape_cast %42 : vector<16x1xf32> to vector<1x16x1xf32>
      %cst_39 = arith.constant dense<0.000000e+00> : vector<1xf32>
      %53 = vector.multi_reduction <add>, %52, %cst_39 [1, 2] : vector<1x16x1xf32> to vector<1xf32>
      %54 = vector.shape_cast %53 : vector<1xf32> to vector<1x1x1xf32>
      %55 = vector.extract %54[0, 0, 0] : f32 from vector<1x1x1xf32>
      %56 = tpu.iota {dimensions = array<i32: 2>} : vector<1x8x128xi32>
      %c0_i32_40 = arith.constant 0 : i32
      %57 = vector.broadcast %c0_i32_40 : i32 to vector<1x8x128xi32>
      %58 = arith.cmpi eq, %56, %57 : vector<1x8x128xi32>
      %cst_41 = arith.constant 0.000000e+00 : f32
      %59 = vector.broadcast %55 : f32 to vector<1x8x128xf32>
      %60 = vector.broadcast %cst_41 : f32 to vector<1x8x128xf32>
      %61 = arith.select %58, %59, %60 : vector<1x8x128xi1>, vector<1x8x128xf32>
      %c1_i32 = arith.constant 1 : i32
      %62 = vector.broadcast %c1_i32 : i32 to vector<1x8x128xi32>
      %63 = arith.cmpi eq, %56, %62 : vector<1x8x128xi32>
      %cst_42 = arith.constant 0.000000e+00 : f32
      %64 = vector.broadcast %46 : f32 to vector<1x8x128xf32>
      %65 = vector.broadcast %cst_42 : f32 to vector<1x8x128xf32>
      %66 = arith.select %63, %64, %65 : vector<1x8x128xi1>, vector<1x8x128xf32>
      %67 = arith.addf %61, %66 : vector<1x8x128xf32>
      %c2_i32 = arith.constant 2 : i32
      %68 = vector.broadcast %c2_i32 : i32 to vector<1x8x128xi32>
      %69 = arith.cmpi eq, %56, %68 : vector<1x8x128xi32>
      %cst_43 = arith.constant 0.000000e+00 : f32
      %70 = vector.broadcast %51 : f32 to vector<1x8x128xf32>
      %71 = vector.broadcast %cst_43 : f32 to vector<1x8x128xf32>
      %72 = arith.select %69, %70, %71 : vector<1x8x128xi1>, vector<1x8x128xf32>
      %73 = arith.addf %67, %72 : vector<1x8x128xf32>
      %c0_44 = arith.constant 0 : index
      %c0_45 = arith.constant 0 : index
      %c0_46 = arith.constant 0 : index
      %74 = vector.load %arg10[%c0_44, %c0_45, %c0_46] : memref<1x8x128xf32, #tpu.memory_space<vmem>>, vector<1x8x128xf32>
      tpu.vector_store %arg10[%c0_44, %c0_45, %c0_46], %73 {strides = array<i32>} : memref<1x8x128xf32, #tpu.memory_space<vmem>>, vector<1x8x128xf32>,
    } else {
    }
    return
  }
  func.func @transform_0(%arg0: i32, %arg1: i32) -> (i32, i32) {
    %c0_i32 = arith.constant 0 : i32
    %c0_i32_0 = arith.constant 0 : i32
    return %arg0, %c0_i32 : i32, i32
  }
  func.func @transform_1(%arg0: i32, %arg1: i32) -> (i32, i32) {
    %c0_i32 = arith.constant 0 : i32
    %c0_i32_0 = arith.constant 0 : i32
    return %c0_i32, %arg1 : i32, i32
  }
  func.func @transform_2(%arg0: i32, %arg1: i32) -> (i32, i32) {
    %c0_i32 = arith.constant 0 : i32
    %c0_i32_0 = arith.constant 0 : i32
    return %arg1, %c0_i32 : i32, i32
  }
  func.func @transform_3(%arg0: i32, %arg1: i32) -> (i32, i32) {
    %c0_i32 = arith.constant 0 : i32
    %c0_i32_0 = arith.constant 0 : i32
    %c0_i32_1 = arith.constant 0 : i32
    return %c0_i32, %c0_i32_0 : i32, i32
  }
  func.func @transform_4(%arg0: i32, %arg1: i32) -> (i32, i32) {
    %c0_i32 = arith.constant 0 : i32
    %c0_i32_0 = arith.constant 0 : i32
    return %c0_i32, %arg1 : i32, i32
  }
  func.func @transform_5(%arg0: i32, %arg1: i32) -> (i32, i32) {
    %c0_i32 = arith.constant 0 : i32
    %c0_i32_0 = arith.constant 0 : i32
    return %c0_i32, %arg1 : i32, i32
  }
  func.func @transform_6(%arg0: i32, %arg1: i32) -> (i32, i32) {
    %c0_i32 = arith.constant 0 : i32
    return %arg0, %arg1 : i32, i32
  }
  func.func @transform_7(%arg0: i32, %arg1: i32) -> (i32, i32) {
    %c0_i32 = arith.constant 0 : i32
    %c0_i32_0 = arith.constant 0 : i32
    return %arg0, %c0_i32 : i32, i32
  }
  func.func @transform_8(%arg0: i32, %arg1: i32) -> (i32, i32, i32) {
    %c0_i32 = arith.constant 0 : i32
    %c0_i32_0 = arith.constant 0 : i32
    %c0_i32_1 = arith.constant 0 : i32
    return %arg0, %c0_i32, %c0_i32_0 : i32, i32, i32
  }
}

</mosaic_0001>

<llo_original>
// kernel: tpu_custom_call.1
$region0: #{tpu_custom_call.1}
  #allocation0 [shape = 'u32[]', space=smem, size = 0x4, offset = 0x4, fixed_abs, tag = 'smem constant byte address 0x4 - core index']
  #allocation1 [shape = 'u32[144,128]{1,0:T(1,128)}', space=vmem, size = 0x12000, scoped, tag = 'internal scratch']
  #allocation2 [shape = 'f32[16,128]{1,0:T(8,128)}', space=vmem, size = 0x2000, scoped, tag = 'scratch operand']
  #allocation3 [shape = 'f32[16,1]{1,0:T(8,128)}', space=vmem, size = 0x2000, scoped, tag = 'scratch operand']
  %s0 = inlined_call_operand.hbm [shape: f32[16,128], index: 0, kind: input, shape index: {}]
  %s1 = inlined_call_operand.hbm [shape: f32[128,128], index: 1, kind: input, shape index: {}]
  %s2 = inlined_call_operand.hbm [shape: f32[128,128], index: 2, kind: input, shape index: {}]
  %s3 = inlined_call_operand.vmem [shape: f32[1,128], index: 3, kind: input, shape index: {}]
  %s4 = inlined_call_operand.vmem [shape: f32[1,128], index: 4, kind: input, shape index: {}]
  %s5 = inlined_call_operand.vmem [shape: f32[1,128], index: 5, kind: input, shape index: {}]
  %s6 = inlined_call_operand.hbm [shape: f32[16,128], index: 6, kind: output, shape index: {0}]
  %s7 = inlined_call_operand.hbm [shape: f32[16,128], index: 7, kind: output, shape index: {1}]
  %s8 = inlined_call_operand.hbm [shape: f32[1,8,128], index: 8, kind: output, shape index: {2}]
  %9 = xla_tuple %s6, %s7, %s8
  %s10 = sld [smem:[#allocation0]]
  $region70: #{tpu_custom_call.1} parent=0
    _
  %s12 = ssub.s32 1, %s10
  %s13 = scalar_select 0, %s12, %s10
  $region1: #{tpu_custom_call.1} parent=0
    #allocation4 [shape = 'u8[8192]{0}', space=vmem, size = 0x2000, scoped, tag = 'input window, operand 0, single buffered']
    #allocation5 [shape = 's32[1]{0}', space=sflag, size = 0x4, scoped, tag = 'scoped memory for tpu_custom_call.1']
    #allocation6 [shape = 's32[1]{0}', space=sflag, size = 0x4, scoped, tag = 'scoped memory for tpu_custom_call.1']
    #allocation7 [shape = 'u8[65536]{0}', space=vmem, size = 0x10000, scoped, tag = 'input window, operand 1, single buffered']
    #allocation8 [shape = 's32[1]{0}', space=sflag, size = 0x4, scoped, tag = 'scoped memory for tpu_custom_call.1']
    #allocation9 [shape = 'u8[65536]{0}', space=vmem, size = 0x10000, scoped, tag = 'input window, operand 2, single buffered']
    #allocation10 [shape = 'u8[8192]{0}', space=vmem, size = 0x2000, scoped, tag = 'output window, operand 0, single buffered']
    #allocation11 [shape = 'u8[8192]{0}', space=vmem, size = 0x2000, scoped, tag = 'output window, operand 1, single buffered']
    #allocation12 [shape = 's32[1]{0}', space=sflag, size = 0x4, scoped, tag = 'scoped memory for tpu_custom_call.1']
    #allocation13 [shape = 'u8[4096]{0}', space=vmem, size = 0x1000, scoped, tag = 'output window, operand 2, single buffered']
    %14 = vsyncpa [#allocation5], 0
    %15 = vsyncpa [#allocation8], 0
    %16 = vsyncpa [#allocation6], 0
    %17 = vsyncpa [#allocation12], 0
    // Predicated region
    $region2: #{tpu_custom_call.1} parent=1 // pred_check
      _
    $region3: #{tpu_custom_call.1} parent=1 // pred_check_branch
      %19 = sbr.rel (0) target = $region5
    $region4: #{tpu_custom_call.1} parent=1 // pred_region
      %s21 = ssub.s32 256, 256
      %22 = vsyncadd [#allocation5], %s21
      %s23 = sshll.u32 [#allocation4], 4
      %s24 = int_to_ptr.vmem [resolvable:$true] %s23
      %29 = dma.hbm_to_vmem [thread:$0]  %s0, 256, %s24, [#allocation5], 128, 128, 8
    $region5: #{tpu_custom_call.1} parent=1 // pred_fallthru
      _
    // Predicated region
    $region6: #{tpu_custom_call.1} parent=1 // pred_check
      _
    $region7: #{tpu_custom_call.1} parent=1 // pred_check_branch
      %31 = sbr.rel (0) target = $region9
    $region8: #{tpu_custom_call.1} parent=1 // pred_region
      %s33 = ssub.s32 2048, 2048
      %34 = vsyncadd [#allocation8], %s33
      %s35 = sshll.u32 [#allocation7], 4
      %s36 = int_to_ptr.vmem [resolvable:$true] %s35
      %41 = dma.hbm_to_vmem [thread:$0]  %s1, 2048, %s36, [#allocation8], 128, 128, 8
    $region9: #{tpu_custom_call.1} parent=1 // pred_fallthru
      _
    // Predicated region
    $region10: #{tpu_custom_call.1} parent=1 // pred_check
      _
    $region11: #{tpu_custom_call.1} parent=1 // pred_check_branch
      %43 = sbr.rel (0) target = $region13
    $region12: #{tpu_custom_call.1} parent=1 // pred_region
      %s45 = ssub.s32 2048, 2048
      %46 = vsyncadd [#allocation8], %s45
      %s47 = sshll.u32 [#allocation9], 4
      %s48 = int_to_ptr.vmem [resolvable:$true] %s47
      %53 = dma.hbm_to_vmem [thread:$0]  %s2, 2048, %s48, [#allocation8], 128, 128, 8
    $region13: #{tpu_custom_call.1} parent=1 // pred_fallthru
      _
    // Predicated region
    $region14: #{tpu_custom_call.1} parent=1 // pred_check
      _
    $region15: #{tpu_custom_call.1} parent=1 // pred_check_branch
      %55 = sbr.rel (0) target = $region17
    $region16: #{tpu_custom_call.1} parent=1 // pred_region
      _
    $region17: #{tpu_custom_call.1} parent=1 // pred_fallthru
      _
    // Predicated region
    $region18: #{tpu_custom_call.1} parent=1 // pred_check
      _
    $region19: #{tpu_custom_call.1} parent=1 // pred_check_branch
      %57 = sbr.rel (0) target = $region21
    $region20: #{tpu_custom_call.1} parent=1 // pred_region
      _
    $region21: #{tpu_custom_call.1} parent=1 // pred_fallthru
      _
    // Predicated region
    $region22: #{tpu_custom_call.1} parent=1 // pred_check
      _
    $region23: #{tpu_custom_call.1} parent=1 // pred_check_branch
      %59 = sbr.rel (0) target = $region25
    $region24: #{tpu_custom_call.1} parent=1 // pred_region
      _
    $region25: #{tpu_custom_call.1} parent=1 // pred_fallthru
      _
    // Predicated region
    $region26: #{tpu_custom_call.1} parent=1 // pred_check
      _
    $region27: #{tpu_custom_call.1} parent=1 // pred_check_branch
      %61 = sbr.rel (0) target = $region29
    $region28: #{tpu_custom_call.1} parent=1 // pred_region
      %62 = dma.done [#allocation5], 256
    $region29: #{tpu_custom_call.1} parent=1 // pred_fallthru
      _
    // Predicated region
    $region30: #{tpu_custom_call.1} parent=1 // pred_check
      _
    $region31: #{tpu_custom_call.1} parent=1 // pred_check_branch
      %64 = sbr.rel (0) target = $region33
    $region32: #{tpu_custom_call.1} parent=1 // pred_region
      %65 = dma.done [#allocation8], 2048
    $region33: #{tpu_custom_call.1} parent=1 // pred_fallthru
      _
    // Predicated region
    $region34: #{tpu_custom_call.1} parent=1 // pred_check
      _
    $region35: #{tpu_custom_call.1} parent=1 // pred_check_branch
      %67 = sbr.rel (0) target = $region37
    $region36: #{tpu_custom_call.1} parent=1 // pred_region
      %68 = dma.done [#allocation8], 2048
    $region37: #{tpu_custom_call.1} parent=1 // pred_fallthru
      _
    %p69 = scmp.eq.s32.totalorder 0, 0
    // Predicated region
    $region38: #{tpu_custom_call.1} parent=1 // pred_check
      %p70 = pneg %p69
    $region39: #{tpu_custom_call.1} parent=1 // pred_check_branch
      %72 = sbr.rel (%p70) target = $region41
    $region40: #{tpu_custom_call.1} parent=1 // pred_region
      %v73 = vld [vmem:[#allocation4] sm:$0xff]
      %v74 = vld [vmem:[#allocation4 + $0x8] sm:$0xff]
      %v75 = vld [vmem:[%s3] sm:$0x1]
      %v77 = vlaneseq
      %v78 = vshrl.u32 %v77, 7
      %v79 = vsub.s32 0, %v78
      %v80 = vrot.slane %v75, %v79
      %v82 = vsub.f32 %v73, %v80
      %v83 = vsub.f32 %v74, %v80
      %84 = vst [vmem:[#allocation2] sm:$0xff] %v82
      %85 = vst [vmem:[#allocation2 + $0x8] sm:$0xff] %v83
      %86 = vst [vmem:[#allocation11] sm:$0xff] 0.0
      %87 = vst [vmem:[#allocation11 + $0x8] sm:$0xff] 0.0
      %vm88 = vcmask 7168
      %89 = vst.msk [vmem:[#allocation3] sm:$0xff] %vm88, 0.0
      %90 = vst.msk [vmem:[#allocation3 + $0x8] sm:$0xff] %vm88, 0.0
    $region41: #{tpu_custom_call.1} parent=1 // pred_fallthru
      _
    %v91 = vld [vmem:[#allocation2] sm:$0xff]
    %v92 = vld [vmem:[#allocation2 + $0x8] sm:$0xff]
    %v93 = vld [vmem:[#allocation7] sm:$0xff]
    %v94 = vld [vmem:[#allocation7 + $0x8] sm:$0xff]
    %v95 = vld [vmem:[#allocation7 + $0x10] sm:$0xff]
    %v96 = vld [vmem:[#allocation7 + $0x18] sm:$0xff]
    %v97 = vld [vmem:[#allocation7 + $0x20] sm:$0xff]
    %v98 = vld [vmem:[#allocation7 + $0x28] sm:$0xff]
    %v99 = vld [vmem:[#allocation7 + $0x30] sm:$0xff]
    %v100 = vld [vmem:[#allocation7 + $0x38] sm:$0xff]
    %v101 = vld [vmem:[#allocation7 + $0x40] sm:$0xff]
    %v102 = vld [vmem:[#allocation7 + $0x48] sm:$0xff]
    %v103 = vld [vmem:[#allocation7 + $0x50] sm:$0xff]
    %v104 = vld [vmem:[#allocation7 + $0x58] sm:$0xff]
    %v105 = vld [vmem:[#allocation7 + $0x60] sm:$0xff]
    %v106 = vld [vmem:[#allocation7 + $0x68] sm:$0xff]
    %v107 = vld [vmem:[#allocation7 + $0x70] sm:$0xff]
    %v108 = vld [vmem:[#allocation7 + $0x78] sm:$0xff]
    %v109 = vld [vmem:[%s4] sm:$0x1]
    %v111 = vlaneseq
    %v112 = vshrl.u32 %v111, 7
    %v113 = vsub.s32 0, %v112
    %v114 = vrot.slane %v109, %v113
    %116 = vmatprep.subr.mxu0 0.0
    %117 = vmatpush1.msra.mxu0 %v108
    %118 = vmatprep.subr.mxu0 0.0
    %119 = vmatpush1.msra.mxu0 %v107
    %120 = vmatprep.subr.mxu0 0.0
    %121 = vmatpush1.msra.mxu0 %v106
    %122 = vmatprep.subr.mxu0 0.0
    %123 = vmatpush1.msra.mxu0 %v105
    %124 = vmatprep.subr.mxu0 0.0
    %125 = vmatpush1.msra.mxu0 %v104
    %126 = vmatprep.subr.mxu0 0.0
    %127 = vmatpush1.msra.mxu0 %v103
    %128 = vmatprep.subr.mxu0 0.0
    %129 = vmatpush1.msra.mxu0 %v102
    %130 = vmatprep.subr.mxu0 0.0
    %131 = vmatpush1.msra.mxu0 %v101
    %132 = vmatprep.subr.mxu0 0.0
    %133 = vmatpush1.msra.mxu0 %v100
    %134 = vmatprep.subr.mxu0 0.0
    %135 = vmatpush1.msra.mxu0 %v99
    %136 = vmatprep.subr.mxu0 0.0
    %137 = vmatpush1.msra.mxu0 %v98
    %138 = vmatprep.subr.mxu0 0.0
    %139 = vmatpush1.msra.mxu0 %v97
    %140 = vmatprep.subr.mxu0 0.0
    %141 = vmatpush1.msra.mxu0 %v96
    %142 = vmatprep.subr.mxu0 0.0
    %143 = vmatpush1.msra.mxu0 %v95
    %144 = vmatprep.subr.mxu0 0.0
    %145 = vmatpush1.msra.mxu0 %v94
    %146 = vmatprep.subr.mxu0 0.0
    %147 = vmatpush1.msra.mxu0 %v93
    %148 = vmatprep.subr.mxu0 0.0
    %149 = vmatpush2.msra.mxu0 0.0
    %150 = vmatprep.subr.mxu0 0.0
    %151 = vmatpush2.msra.mxu0 0.0
    %152 = vmatprep.subr.mxu0 0.0
    %153 = vmatpush2.msra.mxu0 0.0
    %154 = vmatprep.subr.mxu0 0.0
    %155 = vmatpush2.msra.mxu0 0.0
    %156 = vmatprep.subr.mxu0 0.0
    %157 = vmatpush2.msra.mxu0 0.0
    %158 = vmatprep.subr.mxu0 0.0
    %159 = vmatpush2.msra.mxu0 0.0
    %160 = vmatprep.subr.mxu0 0.0
    %161 = vmatpush2.msra.mxu0 0.0
    %162 = vmatprep.subr.mxu0 0.0
    %163 = vmatpush2.msra.mxu0 0.0
    %164 = vmatprep.subr.mxu0 0.0
    %165 = vmatpush2.msra.mxu0 0.0
    %166 = vmatprep.subr.mxu0 0.0
    %167 = vmatpush2.msra.mxu0 0.0
    %168 = vmatprep.subr.mxu0 0.0
    %169 = vmatpush2.msra.mxu0 0.0
    %170 = vmatprep.subr.mxu0 0.0
    %171 = vmatpush2.msra.mxu0 0.0
    %172 = vmatprep.subr.mxu0 0.0
    %173 = vmatpush2.msra.mxu0 0.0
    %174 = vmatprep.subr.mxu0 0.0
    %175 = vmatpush2.msra.mxu0 0.0
    %176 = vmatprep.subr.mxu0 0.0
    %177 = vmatpush2.msra.mxu0 0.0
    %178 = vmatprep.subr.mxu0 0.0
    %179 = vmatpush2.msra.mxu0 0.0
    %180 = vmatprep.mubr.f32.mxu0 0.0
    %181 = vmatmul.mubr.f32.gmra.mxu0 %v91
    %v182 = vpop.f32.mrf.mxu0
    %v183 = vadd.f32 %v114, %v182
    %v184 = vpop.f32.mrf.mxu0
    %185 = vmatprep.mubr.f32.mxu0 0.0
    %186 = vmatmul.mubr.f32.gmra.mxu0 %v92
    %v187 = vpop.f32.mrf.mxu0
    %v188 = vadd.f32 %v114, %v187
    %v189 = vpop.f32.mrf.mxu0
    %190 = vdwg.mxu0
    %v191 = vld [vmem:[%s5] sm:$0x1]
    %v193 = vlaneseq
    %v194 = vshrl.u32 %v193, 7
    %v195 = vsub.s32 0, %v194
    %v196 = vrot.slane %v191, %v195
    %v198 = vsub.f32 %v183, %v196
    %v199 = vsub.f32 %v188, %v196
    %vm200 = vcmp.gt.f32.partialorder %v198, 0.0
    %vm201 = vcmp.gt.f32.partialorder %v199, 0.0
    %v202 = vmax.f32 %v183, 0.0
    %v203 = vmax.f32 %v188, 0.0
    %v204 = vsel %vm200, %v202, 0.0
    %v205 = vsel %vm201, %v203, 0.0
    %206 = vst [vmem:[#allocation10] sm:$0xff] %v204
    %207 = vst [vmem:[#allocation10 + $0x8] sm:$0xff] %v205
    %v208 = vld [vmem:[#allocation11] sm:$0xff]
    %v209 = vld [vmem:[#allocation11 + $0x8] sm:$0xff]
    %v210 = vld [vmem:[#allocation9] sm:$0xff]
    %v211 = vld [vmem:[#allocation9 + $0x8] sm:$0xff]
    %v212 = vld [vmem:[#allocation9 + $0x10] sm:$0xff]
    %v213 = vld [vmem:[#allocation9 + $0x18] sm:$0xff]
    %v214 = vld [vmem:[#allocation9 + $0x20] sm:$0xff]
    %v215 = vld [vmem:[#allocation9 + $0x28] sm:$0xff]
    %v216 = vld [vmem:[#allocation9 + $0x30] sm:$0xff]
    %v217 = vld [vmem:[#allocation9 + $0x38] sm:$0xff]
    %v218 = vld [vmem:[#allocation9 + $0x40] sm:$0xff]
    %v219 = vld [vmem:[#allocation9 + $0x48] sm:$0xff]
    %v220 = vld [vmem:[#allocation9 + $0x50] sm:$0xff]
    %v221 = vld [vmem:[#allocation9 + $0x58] sm:$0xff]
    %v222 = vld [vmem:[#allocation9 + $0x60] sm:$0xff]
    %v223 = vld [vmem:[#allocation9 + $0x68] sm:$0xff]
    %v224 = vld [vmem:[#allocation9 + $0x70] sm:$0xff]
    %v225 = vld [vmem:[#allocation9 + $0x78] sm:$0xff]
    %226 = vmatprep.subr.mxu0 0.0
    %227 = vmatpush1.msra.mxu0 %v225
    %228 = vmatprep.subr.mxu0 0.0
    %229 = vmatpush1.msra.mxu0 %v224
    %230 = vmatprep.subr.mxu0 0.0
    %231 = vmatpush1.msra.mxu0 %v223
    %232 = vmatprep.subr.mxu0 0.0
    %233 = vmatpush1.msra.mxu0 %v222
    %234 = vmatprep.subr.mxu0 0.0
    %235 = vmatpush1.msra.mxu0 %v221
    %236 = vmatprep.subr.mxu0 0.0
    %237 = vmatpush1.msra.mxu0 %v220
    %238 = vmatprep.subr.mxu0 0.0
    %239 = vmatpush1.msra.mxu0 %v219
    %240 = vmatprep.subr.mxu0 0.0
    %241 = vmatpush1.msra.mxu0 %v218
    %242 = vmatprep.subr.mxu0 0.0
    %243 = vmatpush1.msra.mxu0 %v217
    %244 = vmatprep.subr.mxu0 0.0
    %245 = vmatpush1.msra.mxu0 %v216
    %246 = vmatprep.subr.mxu0 0.0
    %247 = vmatpush1.msra.mxu0 %v215
    %248 = vmatprep.subr.mxu0 0.0
    %249 = vmatpush1.msra.mxu0 %v214
    %250 = vmatprep.subr.mxu0 0.0
    %251 = vmatpush1.msra.mxu0 %v213
    %252 = vmatprep.subr.mxu0 0.0
    %253 = vmatpush1.msra.mxu0 %v212
    %254 = vmatprep.subr.mxu0 0.0
    %255 = vmatpush1.msra.mxu0 %v211
    %256 = vmatprep.subr.mxu0 0.0
    %257 = vmatpush1.msra.mxu0 %v210
    %258 = vmatprep.subr.mxu0 0.0
    %259 = vmatpush2.msra.mxu0 0.0
    %260 = vmatprep.subr.mxu0 0.0
    %261 = vmatpush2.msra.mxu0 0.0
    %262 = vmatprep.subr.mxu0 0.0
    %263 = vmatpush2.msra.mxu0 0.0
    %264 = vmatprep.subr.mxu0 0.0
    %265 = vmatpush2.msra.mxu0 0.0
    %266 = vmatprep.subr.mxu0 0.0
    %267 = vmatpush2.msra.mxu0 0.0
    %268 = vmatprep.subr.mxu0 0.0
    %269 = vmatpush2.msra.mxu0 0.0
    %270 = vmatprep.subr.mxu0 0.0
    %271 = vmatpush2.msra.mxu0 0.0
    %272 = vmatprep.subr.mxu0 0.0
    %273 = vmatpush2.msra.mxu0 0.0
    %274 = vmatprep.subr.mxu0 0.0
    %275 = vmatpush2.msra.mxu0 0.0
    %276 = vmatprep.subr.mxu0 0.0
    %277 = vmatpush2.msra.mxu0 0.0
    %278 = vmatprep.subr.mxu0 0.0
    %279 = vmatpush2.msra.mxu0 0.0
    %280 = vmatprep.subr.mxu0 0.0
    %281 = vmatpush2.msra.mxu0 0.0
    %282 = vmatprep.subr.mxu0 0.0
    %283 = vmatpush2.msra.mxu0 0.0
    %284 = vmatprep.subr.mxu0 0.0
    %285 = vmatpush2.msra.mxu0 0.0
    %286 = vmatprep.subr.mxu0 0.0
    %287 = vmatpush2.msra.mxu0 0.0
    %288 = vmatprep.subr.mxu0 0.0
    %289 = vmatpush2.msra.mxu0 0.0
    %290 = vmatprep.mubr.f32.mxu0 0.0
    %291 = vmatmul.mubr.f32.gmra.mxu0 %v204
    %v292 = vpop.f32.mrf.mxu0
    %v293 = vadd.f32 0.0, %v292
    %v294 = vpop.f32.mrf.mxu0
    %295 = vmatprep.mubr.f32.mxu0 0.0
    %296 = vmatmul.mubr.f32.gmra.mxu0 %v205
    %v297 = vpop.f32.mrf.mxu0
    %v298 = vadd.f32 0.0, %v297
    %v299 = vpop.f32.mrf.mxu0
    %300 = vdwg.mxu0
    %v301 = vadd.f32 %v208, %v293
    %v302 = vadd.f32 %v209, %v298
    %303 = vst [vmem:[#allocation11] sm:$0xff] %v301
    %304 = vst [vmem:[#allocation11 + $0x8] sm:$0xff] %v302
    %v305 = vld [vmem:[#allocation3] sm:$0xff]
    %v306 = vld [vmem:[#allocation3 + $0x8] sm:$0xff]
    %v307 = vsel %vm200, 1, 0
    %v308 = vsel %vm201, 1, 0
    %v309 = vcvt.s32.f32 %v307
    %v310 = vcvt.s32.f32 %v308
    %311 = vadd.xlane.f32.xlu0 %v309
    %v312 = vpop.xlane.xlu0 %311
    %313 = vadd.xlane.f32.xlu0 %v310
    %v314 = vpop.xlane.xlu0 %313
    %v315 = vadd.f32 %v305, %v312
    %v316 = vadd.f32 %v306, %v314
    %vm317 = vcmask 7168
    %318 = vst.msk [vmem:[#allocation3] sm:$0xff] %vm317, %v315
    %319 = vst.msk [vmem:[#allocation3 + $0x8] sm:$0xff] %vm317, %v316
    // Predicated region
    $region42: #{tpu_custom_call.1} parent=1 // pred_check
      %p320 = pneg %p69
    $region43: #{tpu_custom_call.1} parent=1 // pred_check_branch
      %322 = sbr.rel (%p320) target = $region45
    $region44: #{tpu_custom_call.1} parent=1 // pred_region
      %v323 = vld [vmem:[#allocation4] sm:$0xff]
      %v324 = vld [vmem:[#allocation4 + $0x8] sm:$0xff]
      %v325 = vld [vmem:[#allocation11] sm:$0xff]
      %v326 = vld [vmem:[#allocation11 + $0x8] sm:$0xff]
      %v327 = vld [vmem:[%s3] sm:$0x1]
      %v329 = vlaneseq
      %v330 = vshrl.u32 %v329, 7
      %v331 = vsub.s32 0, %v330
      %v332 = vrot.slane %v327, %v331
      %v334 = vadd.f32 %v325, %v332
      %v335 = vadd.f32 %v326, %v332
      %336 = vst [vmem:[#allocation11] sm:$0xff] %v334
      %337 = vst [vmem:[#allocation11 + $0x8] sm:$0xff] %v335
      %v338 = vsub.f32 %v323, %v334
      %v339 = vsub.f32 %v324, %v335
      %v340 = vmul.f32 %v338, %v338
      %v341 = vmul.f32 %v339, %v339
      %v342 = vld [vmem:[#allocation3] sm:$0xff]
      %v343 = vld [vmem:[#allocation3 + $0x8] sm:$0xff]
      %v344 = vadd.f32 %v340, %v341
      %345 = vadd.xlane.f32.xlu0 %v344
      %v346 = vpop.xlane.xlu0 %345
      %v347 = vrot.slane %v346, 4
      %v348 = vadd.f32 %v346, %v347
      %v349 = vrot.slane %v348, 2
      %v350 = vadd.f32 %v348, %v349
      %v351 = vrot.slane %v350, 1
      %v352 = vadd.f32 %v350, %v351
      %s353 = vtos %v352
      %v354 = vmul.f32 %v323, %v323
      %v355 = vmul.f32 %v324, %v324
      %v356 = vadd.f32 %v354, %v355
      %357 = vadd.xlane.f32.xlu0 %v356
      %v358 = vpop.xlane.xlu0 %357
      %v359 = vrot.slane %v358, 4
      %v360 = vadd.f32 %v358, %v359
      %v361 = vrot.slane %v360, 2
      %v362 = vadd.f32 %v360, %v361
      %v363 = vrot.slane %v362, 1
      %v364 = vadd.f32 %v362, %v363
      %s365 = vtos %v364
      %v366 = vsel %vm317, %v342, 0.0
      %v367 = vsel %vm317, %v343, 0.0
      %v368 = vadd.f32 %v366, %v367
      %369 = vadd.xlane.f32.xlu0 %v368
      %v370 = vpop.xlane.xlu0 %369
      %v371 = vrot.slane %v370, 4
      %v372 = vadd.f32 %v370, %v371
      %v373 = vrot.slane %v372, 2
      %v374 = vadd.f32 %v372, %v373
      %v375 = vrot.slane %v374, 1
      %v376 = vadd.f32 %v374, %v375
      %s377 = vtos %v376
      %v378 = vlaneseq
      %v379 = vand.u32 %v378, 127
      %vm380 = vcmp.eq.s32.totalorder %v379, 0
      %v381 = vstv %s377
      %v382 = vsel %vm380, %v381, 0.0
      %vm383 = vcmp.eq.s32.totalorder %v379, 1
      %v384 = vstv %s353
      %v385 = vsel %vm383, %v384, 0.0
      %v386 = vadd.f32 %v382, %v385
      %vm387 = vcmp.eq.s32.totalorder %v379, 2
      %v388 = vstv %s365
      %v389 = vsel %vm387, %v388, 0.0
      %v390 = vadd.f32 %v386, %v389
      %391 = vst [vmem:[#allocation13] sm:$0xff] %v390
    $region45: #{tpu_custom_call.1} parent=1 // pred_fallthru
      _
    // Predicated region
    $region46: #{tpu_custom_call.1} parent=1 // pred_check
      _
    $region47: #{tpu_custom_call.1} parent=1 // pred_check_branch
      %393 = sbr.rel (0) target = $region49
    $region48: #{tpu_custom_call.1} parent=1 // pred_region
      %s395 = ssub.s32 256, 256
      %396 = vsyncadd [#allocation6], %s395
      %s397 = sshll.u32 [#allocation10], 4
      %s398 = int_to_ptr.vmem [resolvable:$true] %s397
      %403 = dma.vmem_to_hbm [thread:$0]  %s398, 256, %s6, [#allocation6], 128, 128, 8
    $region49: #{tpu_custom_call.1} parent=1 // pred_fallthru
      _
    // Predicated region
    $region50: #{tpu_custom_call.1} parent=1 // pred_check
      _
    $region51: #{tpu_custom_call.1} parent=1 // pred_check_branch
      %405 = sbr.rel (0) target = $region53
    $region52: #{tpu_custom_call.1} parent=1 // pred_region
      %s407 = ssub.s32 256, 256
      %408 = vsyncadd [#allocation12], %s407
      %s409 = sshll.u32 [#allocation11], 4
      %s410 = int_to_ptr.vmem [resolvable:$true] %s409
      %415 = dma.vmem_to_hbm [thread:$0]  %s410, 256, %s7, [#allocation12], 128, 128, 8
    $region53: #{tpu_custom_call.1} parent=1 // pred_fallthru
      _
    // Predicated region
    $region54: #{tpu_custom_call.1} parent=1 // pred_check
      _
    $region55: #{tpu_custom_call.1} parent=1 // pred_check_branch
      %417 = sbr.rel (0) target = $region57
    $region56: #{tpu_custom_call.1} parent=1 // pred_region
      %s419 = ssub.s32 128, 128
      %420 = vsyncadd [#allocation12], %s419
      %s422 = sshll.u32 [#allocation13], 4
      %s423 = int_to_ptr.vmem [resolvable:$true] %s422
      %425 = dma.vmem_to_hbm [thread:$0]  %s423, 128, %s8, [#allocation12]
    $region57: #{tpu_custom_call.1} parent=1 // pred_fallthru
      _
    // Predicated region
    $region58: #{tpu_custom_call.1} parent=1 // pred_check
      _
    $region59: #{tpu_custom_call.1} parent=1 // pred_check_branch
      %427 = sbr.rel (0) target = $region61
    $region60: #{tpu_custom_call.1} parent=1 // pred_region
      %428 = dma.done [#allocation6], 256
    $region61: #{tpu_custom_call.1} parent=1 // pred_fallthru
      _
    // Predicated region
    $region62: #{tpu_custom_call.1} parent=1 // pred_check
      _
    $region63: #{tpu_custom_call.1} parent=1 // pred_check_branch
      %430 = sbr.rel (0) target = $region65
    $region64: #{tpu_custom_call.1} parent=1 // pred_region
      %431 = dma.done [#allocation12], 256
    $region65: #{tpu_custom_call.1} parent=1 // pred_fallthru
      _
    // Predicated region
    $region66: #{tpu_custom_call.1} parent=1 // pred_check
      _
    $region67: #{tpu_custom_call.1} parent=1 // pred_check_branch
      %433 = sbr.rel (0) target = $region69
    $region68: #{tpu_custom_call.1} parent=1 // pred_region
      %434 = dma.done [#allocation12], 128
    $region69: #{tpu_custom_call.1} parent=1 // pred_fallthru
      _
    %435 = vsyncpa [#allocation5], 1
    %436 = vsyncpa [#allocation8], 1
    %437 = vsyncpa [#allocation6], 1
    %438 = vsyncpa [#allocation12], 1

</llo_original>
